<compile_context>
chip_gen: v7x
topology: tpu7x:2x2x1
jax: 0.10.0
libtpu: 0.0.40
codegen_flags: <defaults>
</compile_context>

<pallas_src>
import functools
import math

import jax
import jax.numpy as jnp
from jax import lax
from jax.experimental import pallas as pl
from jax.experimental.pallas import tpu as pltpu


# --------------------------------------------------------------------------- #
# Kernel
# --------------------------------------------------------------------------- #
def _clip_loss_kernel(p_ref, t_ref, col_out_ref, row_out_ref,
                      row_sum_ref, diag_ref,
                      *, inv_temperature, tm, tn, k_real, k_pad):
    """One (row-tile i, col-tile j) step over the square K_pad x K_pad logits.

    Emits, per row tile i:
      col_out[i, 0, j*tn:(j+1)*tn] : column-direction partial exp-sums
      row_out[i, 0, 0]             : sum_r log(row_sum_r) - (2/T) * sum diag cos
    The scalar loss is finished by a tiny JAX epilogue; keeping the row axis
    free of cross-step state lets it be "parallel" (megacore on v7x).
    """
    i = pl.program_id(0)          # row tile  (point features)  -- parallel
    j = pl.program_id(1)          # col tile  (text  features)  -- arbitrary
    n_j = pl.num_programs(1)

    @pl.when(j == 0)
    def _init():
        row_sum_ref[...] = jnp.zeros_like(row_sum_ref)
        diag_ref[...] = jnp.zeros_like(diag_ref)

    # Cosine-similarity tile on the MXU.  Both operands contract on their last
    # (lane-contiguous D) axis -- same orientation as flash-attention q@k^T --
    # inputs stay in their native dtype, accumulation is f32.
    # (If a bundle dump ever shows a per-step relayout of the t tile, the
    #  alternative is a one-time host transpose of text to (D, K).)
    cos = lax.dot_general(
        p_ref[...], t_ref[...],
        dimension_numbers=(((1,), (1,)), ((), ())),
        preferred_element_type=jnp.float32)

    # Normalized features (module contract) => cos <= 1, so exp((cos - 1)/T) is
    # a valid constant-shift softmax numerator for BOTH directions: one EUP pass.
    e = jnp.exp((cos - 1.0) * inv_temperature)

    if k_real < k_pad:
        # Zero the contributions of zero-padded rows / columns.
        rid = i * tm + lax.broadcasted_iota(jnp.int32, (tm, tn), 0)
        cid = j * tn + lax.broadcasted_iota(jnp.int32, (tm, tn), 1)
        e = jnp.where((rid < k_real) & (cid < k_real), e, 0.0)

    # Row-direction (lane-axis) partial sums, accumulated over column tiles.
    row_sum_ref[...] += jnp.sum(e, axis=1, keepdims=True)

    # Column-direction (sublane-axis) partial sums: one lane-dense output block
    # per (i, j) step; the cross-row-tile reduction happens in the epilogue.
    col_out_ref[...] = jnp.sum(e, axis=0, keepdims=True).reshape(1, 1, tn)

    # Diagonal logits, taken from the already-computed cos tile, only on tiles
    # that actually intersect the diagonal (i == j when tm == tn).
    intersects = (j * tn < (i + 1) * tm) & (i * tm < (j + 1) * tn)

    @pl.when(intersects)
    def _diag():
        rid = i * tm + lax.broadcasted_iota(jnp.int32, (tm, tn), 0)
        cid = j * tn + lax.broadcasted_iota(jnp.int32, (tm, tn), 1)
        # Padded rows/cols are zero vectors => their cos is exactly 0.
        d = jnp.where(rid == cid, cos, 0.0)
        diag_ref[...] += jnp.sum(d, keepdims=True)

    # A row tile is complete once it has seen the last column tile.
    @pl.when(j == n_j - 1)
    def _row_final():
        rs = row_sum_ref[...]
        if k_real < k_pad:
            rid = i * tm + lax.broadcasted_iota(jnp.int32, (tm, 1), 0)
            rs = jnp.where(rid < k_real, rs, 1.0)     # log(1) = 0 for pad rows
        partial = jnp.sum(jnp.log(rs), keepdims=True)                   # (1, 1)
        partial = partial - (2.0 * inv_temperature) * diag_ref[...]
        row_out_ref[...] = partial.reshape(1, 1, 1)


# --------------------------------------------------------------------------- #
# Host-side helpers
# --------------------------------------------------------------------------- #
def _round_up(x: int, m: int) -> int:
    return ((x + m - 1) // m) * m


def _vmem_capacity_bytes() -> int:
    try:
        return int(pltpu.get_tpu_info().vmem_capacity_bytes)
    except Exception:
        return 64 * 1024 * 1024          # conservative: v7x per-core VMEM


def _vmem_estimate(tm: int, tn: int, d: int, in_bytes: int) -> int:
    blocks = 2 * (tm + tn) * d * in_bytes        # double-buffered p / t tiles
    inter = 2 * tm * tn * 4                      # cos + e f32 intermediates
    outs = 2 * (tn + 1) * 4 + 1024               # per-step output blocks
    scratch = tm * 128 * 4 + 1024                # lane-padded (tm, 1) row sums
    return blocks + inter + outs + scratch


def _choose_tiles(k_pad, d, in_bytes, budget, row_tile, col_tile):
    """Pick (row_tile, col_tile) for the K_pad x K_pad logits."""
    if row_tile is not None and col_tile is not None:
        return row_tile, col_tile

    divisors = sorted({k_pad, *[t for t in (1024, 512, 256, 128, 64, 32, 16, 8)
                                if k_pad % t == 0]}, reverse=True)
    row_cands = [row_tile] if row_tile is not None else divisors

    # 1) Preferred: keep the whole text matrix VMEM-resident (tn == K_pad) so
    #    its HBM traffic is the compulsory K*D bytes; pick the biggest row tile
    #    that still fits the budget.
    tn = col_tile if col_tile is not None else k_pad
    for tm in row_cands:
        if _vmem_estimate(tm, tn, d, in_bytes) <= budget:
            return tm, tn
    if col_tile is not None:
        return row_cands[-1], col_tile

    # 2) Text too large for residency: stream square-ish tiles.  Column tiles
    #    stay lane-aligned (multiple of 128, or the full K_pad) so the per-step
    #    column-partial output block is an unmasked lane-dense store.
    tiled = [t for t in divisors if t % 128 == 0 or t == k_pad] or [divisors[-1]]
    for t in tiled:
        tm = row_tile if row_tile is not None else t
        if _vmem_estimate(tm, t, d, in_bytes) <= budget:
            return tm, t
    return (row_tile if row_tile is not None else tiled[-1]), tiled[-1]


# --------------------------------------------------------------------------- #
# Public wrapper
# --------------------------------------------------------------------------- #
def clip_similarity_loss(point_features: jax.Array,
                         text_features: jax.Array,
                         temperature: float = 0.07,
                         *,
                         row_tile: int | None = None,
                         col_tile: int | None = None,
                         matmul_dtype=None,
                         vmem_budget_bytes: int | None = None) -> jax.Array:
    """CLIP-style contrastive loss matching the PyTorch reference forward.

    NOTE: per the module contract the features are L2-normalized; the kernel
    exploits cos <= 1 for a constant shifted-exp softmax (passing features with
    large norms would overflow the exp).
    """
    if point_features.ndim != 2 or text_features.ndim != 2:
        raise ValueError("expected [N, D] and [M, D] feature matrices")
    N, D = point_features.shape
    M, D2 = text_features.shape
    if D != D2:
        raise ValueError("feature dims must match")
    K = min(N, M)
    if K == 0:
        raise ValueError("need at least one point and one text feature")

    p, t = point_features, text_features
    if matmul_dtype is not None:
        # e.g. jnp.bfloat16: halves HBM/VMEM traffic and hits the bf16 MXU fast
        # path (largest relative win on v5e, whose MXU is bf16-only).
        p = p.astype(matmul_dtype)
        t = t.astype(matmul_dtype)
    in_bytes = jnp.dtype(p.dtype).itemsize

    # ---- alignment / padding of the square K x K logits -------------------- #
    if row_tile is not None or col_tile is not None:
        align = 8
        for tile_arg in (row_tile, col_tile):
            if tile_arg is not None:
                if tile_arg % 8 != 0:
                    raise ValueError("tiles must be multiples of 8")
                align = math.lcm(align, tile_arg)
    else:
        align = 256 if K > 256 else 8          # full MXU tiles for large K
    k_pad = _round_up(K, align)

    # ---- generation-aware VMEM budget & tile choice ------------------------ #
    cap = _vmem_capacity_bytes()
    # ~48 MiB on v7x (64 MiB physical/core), ~96 MiB on v5e/v6e (128 MiB).
    vmem_limit = int(min((cap * 3) // 4, 100 * 1024 * 1024))
    budget = (vmem_budget_bytes if vmem_budget_bytes is not None
              else (vmem_limit * 7) // 10)
    if col_tile is not None and not (col_tile % 128 == 0 or col_tile == k_pad):
        raise ValueError("col_tile must be a multiple of 128 or cover all of K")
    tm, tn = _choose_tiles(k_pad, D, in_bytes, budget, row_tile, col_tile)
    n_i, n_j = k_pad // tm, k_pad // tn

    # ---- host-side crop/pad only when K needs alignment padding ------------ #
    if k_pad != K:
        p_in = jnp.zeros((k_pad, D), p.dtype).at[:K].set(p[:K])
        t_in = jnp.zeros((k_pad, D), t.dtype).at[:K].set(t[:K])
    else:
        # Index maps only ever touch the first K rows; no host copy needed.
        p_in, t_in = p, t

    kernel = functools.partial(
        _clip_loss_kernel,
        inv_temperature=1.0 / float(temperature),
        tm=tm, tn=tn, k_real=K, k_pad=k_pad)

    col_part, row_part = pl.pallas_call(
        kernel,
        out_shape=(jax.ShapeDtypeStruct((n_i, 1, k_pad), jnp.float32),
                   jax.ShapeDtypeStruct((n_i, 1, 1), jnp.float32)),
        grid_spec=pltpu.PrefetchScalarGridSpec(
            num_scalar_prefetch=0,
            grid=(n_i, n_j),
            in_specs=[
                pl.BlockSpec((tm, D), lambda i, j: (i, 0)),   # point tile
                pl.BlockSpec((tn, D), lambda i, j: (j, 0)),   # text tile
            ],
            out_specs=[
                pl.BlockSpec((1, 1, tn), lambda i, j: (i, 0, j)),
                pl.BlockSpec((1, 1, 1), lambda i, j: (i, 0, 0)),
            ],
            scratch_shapes=[
                pltpu.VMEM((tm, 1), jnp.float32),   # row exp-sums
                pltpu.VMEM((1, 1), jnp.float32),    # diagonal cos accumulator
            ]),
        compiler_params=pltpu.CompilerParams(
            # Row-tile axis carries no cross-step state -> megacore-shardable
            # (2 TCs on v7x); only the column axis is a reduction.
            dimension_semantics=("parallel", "arbitrary"),
            vmem_limit_bytes=vmem_limit),
    )(p_in, t_in)

    # Tiny JAX epilogue: finish the two softmax directions and average.
    col_sum = jnp.sum(col_part[:, 0, :K], axis=0)                    # (K,)
    total = jnp.sum(row_part) + jnp.sum(jnp.log(col_sum))
    return total / (2.0 * K) + 1.0 / float(temperature)


# --------------------------------------------------------------------------- #
# Pure-JAX reference (mirrors the PyTorch module) and smoke tests
# --------------------------------------------------------------------------- #
def _reference_loss(point_features, text_features, temperature=0.07):
    logits = jnp.matmul(point_features, text_features.T) / temperature
    n, m = logits.shape
    k = min(n, m)
    logits = logits[:k, :k]
    diag = jnp.diag(logits)
    loss_i = jnp.mean(jax.nn.logsumexp(logits, axis=1) - diag)
    loss_t = jnp.mean(jax.nn.logsumexp(logits, axis=0) - diag)
    return (loss_i + loss_t) / 2.0


if __name__ == "__main__":
    key = jax.random.PRNGKey(0)
    ks = jax.random.split(key, 6)

    def _make(k, n, d):
        x = jax.random.normal(k, (n, d), dtype=jnp.float32)
        x = x / jnp.linalg.norm(x, axis=-1, keepdims=True)
        # Round to bf16-exact values so the kernel's MXU matmul and the pure-JAX
        # reference agree to f32-accumulation noise regardless of the backend's
        # default matmul precision.
        return x.astype(jnp.bfloat16).astype(jnp.float32)

    cases = []

    # A: aligned square, single resident tile, automatic tile choice.
    cases.append(("square/auto",
                  _make(ks[0], 16, 32), _make(ks[1], 16, 32), {}))

    # B: N != M with padding (K = 112 -> 128), text VMEM-resident, 4 row tiles
    #    (exercises the "parallel" row axis + in-kernel pad masking).
    cases.append(("resident/padded",
                  _make(ks[2], 120, 64), _make(ks[3], 112, 64),
                  {"row_tile": 32}))

    # C: 2D tiled grid (2x2) with padding (K = 250 -> 256) and lane-aligned
    #    128-wide column tiles (exercises diagonal-tile gating + col partials).
    cases.append(("tiled/padded",
                  _make(ks[4], 250, 64), _make(ks[5], 253, 64),
                  {"row_tile": 128, "col_tile": 128}))

    for name, pf, tf, kw in cases:
        got = jax.block_until_ready(
            clip_similarity_loss(pf, tf, temperature=0.07, **kw))
        want = _reference_loss(pf, tf, temperature=0.07)
        if not jnp.allclose(got, want, atol=1e-3, rtol=1e-3):
            raise AssertionError(f"{name}: kernel={got} reference={want}")

    print("KERNEL_OK")
</pallas_src>

<mosaic_0001>
module attributes {stable_mosaic.version = 11 : i64} {
  func.func @_clip_loss_kernel(%arg0: i32, %arg1: i32, %arg2: memref<16x32xf32, #tpu.memory_space<vmem>>, %arg3: memref<16x32xf32, #tpu.memory_space<vmem>>, %arg4: memref<1x1x16xf32, #tpu.memory_space<vmem>>, %arg5: memref<1x1x1xf32, #tpu.memory_space<vmem>>, %arg6: memref<16x1xf32, #tpu.memory_space<vmem>>, %arg7: memref<1x1xf32, #tpu.memory_space<vmem>>) attributes {dimension_semantics = [#tpu.dimension_semantics<parallel>, #tpu.dimension_semantics<arbitrary>], iteration_bounds = array<i64: 1, 1>, scalar_prefetch = 0 : i64, scratch_operands = 2 : i64, tpu.core_type = #tpu.core_type<tc>, window_params = [{transform_indices = @transform_0, window_bounds = array<i64: 16, 32>}, {transform_indices = @transform_1, window_bounds = array<i64: 16, 32>}, {transform_indices = @transform_2, window_bounds = array<i64: 1, 1, 16>}, {transform_indices = @transform_3, window_bounds = array<i64: 1, 1, 1>}]} {
    %c0_i32 = arith.constant 0 : i32
    %0 = arith.cmpi eq, %arg1, %c0_i32 : i32
    %1 = arith.extui %0 : i1 to i32
    %c0_i32_0 = arith.constant 0 : i32
    %2 = arith.cmpi ne, %1, %c0_i32_0 : i32
    scf.if %2 {
      %cst_22 = arith.constant 0.000000e+00 : f32
      %34 = vector.broadcast %cst_22 : f32 to vector<16x1xf32>
      %c0_23 = arith.constant 0 : index
      %c0_24 = arith.constant 0 : index
      %35 = vector.load %arg6[%c0_23, %c0_24] : memref<16x1xf32, #tpu.memory_space<vmem>>, vector<16x1xf32>
      tpu.vector_store %arg6[%c0_23, %c0_24], %34 {strides = array<i32>} : memref<16x1xf32, #tpu.memory_space<vmem>>, vector<16x1xf32>,
      %cst_25 = arith.constant 0.000000e+00 : f32
      %36 = vector.broadcast %cst_25 : f32 to vector<1x1xf32>
      %c0_26 = arith.constant 0 : index
      %c0_27 = arith.constant 0 : index
      %37 = vector.load %arg7[%c0_26, %c0_27] : memref<1x1xf32, #tpu.memory_space<vmem>>, vector<1x1xf32>
      tpu.vector_store %arg7[%c0_26, %c0_27], %36 {strides = array<i32>} : memref<1x1xf32, #tpu.memory_space<vmem>>, vector<1x1xf32>,
    } else {
    }
    %c0 = arith.constant 0 : index
    %c0_1 = arith.constant 0 : index
    %3 = vector.load %arg2[%c0, %c0_1] : memref<16x32xf32, #tpu.memory_space<vmem>>, vector<16x32xf32>
    %c0_2 = arith.constant 0 : index
    %c0_3 = arith.constant 0 : index
    %4 = vector.load %arg3[%c0_2, %c0_3] : memref<16x32xf32, #tpu.memory_space<vmem>>, vector<16x32xf32>
    %cst = arith.constant dense<0.000000e+00> : vector<16x16xf32>
    %5 = tpu.matmul %3, %4, %cst {dimension_numbers = #tpu.dot_dimension_numbers<[1], [1], [0], [0], [0, 0, 1, 0], [], []>} : vector<16x32xf32>, vector<16x32xf32>, vector<16x16xf32> -> vector<16x16xf32>
    %cst_4 = arith.constant 1.000000e+00 : f32
    %6 = vector.broadcast %cst_4 : f32 to vector<16x16xf32>
    %7 = arith.subf %5, %6 : vector<16x16xf32>
    %cst_5 = arith.constant 14.2857141 : f32
    %8 = vector.broadcast %cst_5 : f32 to vector<16x16xf32>
    %9 = arith.mulf %7, %8 : vector<16x16xf32>
    %10 = math.exp %9 : vector<16x16xf32>
    %c0_6 = arith.constant 0 : index
    %c0_7 = arith.constant 0 : index
    %11 = vector.load %arg6[%c0_6, %c0_7] : memref<16x1xf32, #tpu.memory_space<vmem>>, vector<16x1xf32>
    %cst_8 = arith.constant dense<0.000000e+00> : vector<16xf32>
    %12 = vector.multi_reduction <add>, %10, %cst_8 [1] : vector<16x16xf32> to vector<16xf32>
    %13 = vector.shape_cast %12 : vector<16xf32> to vector<16x1xf32>
    %14 = arith.addf %11, %13 : vector<16x1xf32>
    %c0_9 = arith.constant 0 : index
    %c0_10 = arith.constant 0 : index
    %15 = vector.load %arg6[%c0_9, %c0_10] : memref<16x1xf32, #tpu.memory_space<vmem>>, vector<16x1xf32>
    tpu.vector_store %arg6[%c0_9, %c0_10], %14 {strides = array<i32>} : memref<16x1xf32, #tpu.memory_space<vmem>>, vector<16x1xf32>,
    %cst_11 = arith.constant dense<0.000000e+00> : vector<16xf32>
    %16 = vector.multi_reduction <add>, %10, %cst_11 [0] : vector<16x16xf32> to vector<16xf32>
    %17 = vector.shape_cast %16 : vector<16xf32> to vector<1x16xf32>
    %18 = vector.shape_cast %17 : vector<1x16xf32> to vector<1x1x16xf32>
    %c0_12 = arith.constant 0 : index
    %c0_13 = arith.constant 0 : index
    %c0_14 = arith.constant 0 : index
    %19 = vector.load %arg4[%c0_12, %c0_13, %c0_14] : memref<1x1x16xf32, #tpu.memory_space<vmem>>, vector<1x1x16xf32>
    tpu.vector_store %arg4[%c0_12, %c0_13, %c0_14], %18 {strides = array<i32>} : memref<1x1x16xf32, #tpu.memory_space<vmem>>, vector<1x1x16xf32>,
    %c16_i32 = arith.constant 16 : i32
    %20 = arith.muli %arg1, %c16_i32 : i32
    %c1_i32 = arith.constant 1 : i32
    %21 = arith.addi %arg0, %c1_i32 : i32
    %c16_i32_15 = arith.constant 16 : i32
    %22 = arith.muli %21, %c16_i32_15 : i32
    %23 = arith.cmpi slt, %20, %22 : i32
    %c16_i32_16 = arith.constant 16 : i32
    %24 = arith.muli %arg0, %c16_i32_16 : i32
    %c1_i32_17 = arith.constant 1 : i32
    %25 = arith.addi %arg1, %c1_i32_17 : i32
    %c16_i32_18 = arith.constant 16 : i32
    %26 = arith.muli %25, %c16_i32_18 : i32
    %27 = arith.cmpi slt, %24, %26 : i32
    %28 = arith.andi %23, %27 : i1
    %29 = arith.extui %28 : i1 to i32
    %c0_i32_19 = arith.constant 0 : i32
    %30 = arith.cmpi ne, %29, %c0_i32_19 : i32
    scf.if %30 {
      %c16_i32_22 = arith.constant 16 : i32
      %34 = arith.muli %arg0, %c16_i32_22 : i32
      %35 = tpu.iota {dimensions = array<i32: 0>} : vector<16x16xi32>
      %36 = vector.broadcast %34 : i32 to vector<16x16xi32>
      %37 = arith.addi %36, %35 : vector<16x16xi32>
      %c16_i32_23 = arith.constant 16 : i32
      %38 = arith.muli %arg1, %c16_i32_23 : i32
      %39 = tpu.iota {dimensions = array<i32: 1>} : vector<16x16xi32>
      %40 = vector.broadcast %38 : i32 to vector<16x16xi32>
      %41 = arith.addi %40, %39 : vector<16x16xi32>
      %42 = arith.cmpi eq, %37, %41 : vector<16x16xi32>
      %cst_24 = arith.constant 0.000000e+00 : f32
      %43 = vector.broadcast %cst_24 : f32 to vector<16x16xf32>
      %44 = arith.select %42, %5, %43 : vector<16x16xi1>, vector<16x16xf32>
      %c0_25 = arith.constant 0 : index
      %c0_26 = arith.constant 0 : index
      %45 = vector.load %arg7[%c0_25, %c0_26] : memref<1x1xf32, #tpu.memory_space<vmem>>, vector<1x1xf32>
      %46 = vector.shape_cast %44 : vector<16x16xf32> to vector<1x16x16xf32>
      %cst_27 = arith.constant dense<0.000000e+00> : vector<1xf32>
      %47 = vector.multi_reduction <add>, %46, %cst_27 [1, 2] : vector<1x16x16xf32> to vector<1xf32>
      %48 = vector.shape_cast %47 : vector<1xf32> to vector<1x1x1xf32>
      %49 = vector.extract %48[0, 0, 0] : f32 from vector<1x1x1xf32>
      %50 = vector.broadcast %49 : f32 to vector<1x1xf32>
      %51 = arith.addf %45, %50 : vector<1x1xf32>
      %c0_28 = arith.constant 0 : index
      %c0_29 = arith.constant 0 : index
      %52 = vector.load %arg7[%c0_28, %c0_29] : memref<1x1xf32, #tpu.memory_space<vmem>>, vector<1x1xf32>
      tpu.vector_store %arg7[%c0_28, %c0_29], %51 {strides = array<i32>} : memref<1x1xf32, #tpu.memory_space<vmem>>, vector<1x1xf32>,
    } else {
    }
    %c0_i32_20 = arith.constant 0 : i32
    %31 = arith.cmpi eq, %arg1, %c0_i32_20 : i32
    %32 = arith.extui %31 : i1 to i32
    %c0_i32_21 = arith.constant 0 : i32
    %33 = arith.cmpi ne, %32, %c0_i32_21 : i32
    scf.if %33 {
      %c0_22 = arith.constant 0 : index
      %c0_23 = arith.constant 0 : index
      %34 = vector.load %arg6[%c0_22, %c0_23] : memref<16x1xf32, #tpu.memory_space<vmem>>, vector<16x1xf32>
      %35 = math.log %34 : vector<16x1xf32>
      %36 = vector.shape_cast %35 : vector<16x1xf32> to vector<1x16x1xf32>
      %cst_24 = arith.constant dense<0.000000e+00> : vector<1xf32>
      %37 = vector.multi_reduction <add>, %36, %cst_24 [1, 2] : vector<1x16x1xf32> to vector<1xf32>
      %38 = vector.shape_cast %37 : vector<1xf32> to vector<1x1x1xf32>
      %39 = vector.extract %38[0, 0, 0] : f32 from vector<1x1x1xf32>
      %40 = vector.broadcast %39 : f32 to vector<1x1xf32>
      %c0_25 = arith.constant 0 : index
      %c0_26 = arith.constant 0 : index
      %41 = vector.load %arg7[%c0_25, %c0_26] : memref<1x1xf32, #tpu.memory_space<vmem>>, vector<1x1xf32>
      %cst_27 = arith.constant 28.5714283 : f32
      %42 = vector.broadcast %cst_27 : f32 to vector<1x1xf32>
      %43 = arith.mulf %42, %41 : vector<1x1xf32>
      %44 = arith.subf %40, %43 : vector<1x1xf32>
      %45 = vector.shape_cast %44 : vector<1x1xf32> to vector<1x1x1xf32>
      %c0_28 = arith.constant 0 : index
      %c0_29 = arith.constant 0 : index
      %c0_30 = arith.constant 0 : index
      %46 = vector.load %arg5[%c0_28, %c0_29, %c0_30] : memref<1x1x1xf32, #tpu.memory_space<vmem>>, vector<1x1x1xf32>
      tpu.vector_store %arg5[%c0_28, %c0_29, %c0_30], %45 {strides = array<i32>} : memref<1x1x1xf32, #tpu.memory_space<vmem>>, vector<1x1x1xf32>,
    } else {
    }
    return
  }
  func.func @transform_0(%arg0: i32, %arg1: i32) -> (i32, i32) {
    %c0_i32 = arith.constant 0 : i32
    %c0_i32_0 = arith.constant 0 : i32
    return %arg0, %c0_i32 : i32, i32
  }
  func.func @transform_1(%arg0: i32, %arg1: i32) -> (i32, i32) {
    %c0_i32 = arith.constant 0 : i32
    %c0_i32_0 = arith.constant 0 : i32
    return %arg1, %c0_i32 : i32, i32
  }
  func.func @transform_2(%arg0: i32, %arg1: i32) -> (i32, i32, i32) {
    %c0_i32 = arith.constant 0 : i32
    %c0_i32_0 = arith.constant 0 : i32
    return %arg0, %c0_i32, %arg1 : i32, i32, i32
  }
  func.func @transform_3(%arg0: i32, %arg1: i32) -> (i32, i32, i32) {
    %c0_i32 = arith.constant 0 : i32
    %c0_i32_0 = arith.constant 0 : i32
    %c0_i32_1 = arith.constant 0 : i32
    return %arg0, %c0_i32, %c0_i32_0 : i32, i32, i32
  }
}

</mosaic_0001>

<llo_original>
// kernel: tpu_custom_call.1
$region0: #{tpu_custom_call.1}
  #allocation0 [shape = 'u32[]', space=smem, size = 0x4, offset = 0x4, fixed_abs, tag = 'smem constant byte address 0x4 - core index']
  #allocation1 [shape = 'u32[144,128]{1,0:T(1,128)}', space=vmem, size = 0x12000, scoped, tag = 'internal scratch']
  #allocation2 [shape = 'f32[16,1]{1,0:T(8,128)}', space=vmem, size = 0x2000, scoped, tag = 'scratch operand']
  #allocation3 [shape = 'f32[1,1]{1,0:T(1,128)}', space=vmem, size = 0x200, scoped, tag = 'scratch operand']
  %s0 = inlined_call_operand.hbm [shape: f32[16,32], index: 0, kind: input, shape index: {}]
  %s1 = inlined_call_operand.hbm [shape: f32[16,32], index: 1, kind: input, shape index: {}]
  %s2 = inlined_call_operand.hbm [shape: f32[1,1,16], index: 2, kind: output, shape index: {0}]
  %s3 = inlined_call_operand.hbm [shape: f32[1,1,1], index: 3, kind: output, shape index: {1}]
  %4 = xla_tuple %s2, %s3
  %s5 = sld [smem:[#allocation0]]
  $region46: #{tpu_custom_call.1} parent=0
    _
  %s7 = ssub.s32 1, %s5
  %s8 = scalar_select 0, %s7, %s5
  $region1: #{tpu_custom_call.1} parent=0
    #allocation4 [shape = 'u8[8192]{0}', space=vmem, size = 0x2000, scoped, tag = 'input window, operand 0, single buffered']
    #allocation5 [shape = 's32[1]{0}', space=sflag, size = 0x4, scoped, tag = 'scoped memory for tpu_custom_call.1']
    #allocation6 [shape = 's32[1]{0}', space=sflag, size = 0x4, scoped, tag = 'scoped memory for tpu_custom_call.1']
    #allocation7 [shape = 'u8[8192]{0}', space=vmem, size = 0x2000, scoped, tag = 'input window, operand 1, single buffered']
    #allocation8 [shape = 's32[1]{0}', space=sflag, size = 0x4, scoped, tag = 'scoped memory for tpu_custom_call.1']
    #allocation9 [shape = 'u8[512]{0}', space=vmem, size = 0x400, scoped, tag = 'output window, operand 0, single buffered']
    #allocation10 [shape = 'u8[512]{0}', space=vmem, size = 0x400, scoped, tag = 'output window, operand 1, single buffered']
    #allocation11 [shape = 's32[1]{0}', space=sflag, size = 0x4, scoped, tag = 'scoped memory for tpu_custom_call.1']
    %9 = vsyncpa [#allocation5], 0
    %10 = vsyncpa [#allocation8], 0
    %11 = vsyncpa [#allocation6], 0
    %12 = vsyncpa [#allocation11], 0
    // Predicated region
    $region2: #{tpu_custom_call.1} parent=1 // pred_check
      _
    $region3: #{tpu_custom_call.1} parent=1 // pred_check_branch
      %14 = sbr.rel (0) target = $region5
    $region4: #{tpu_custom_call.1} parent=1 // pred_region
      %s16 = ssub.s32 256, 256
      %17 = vsyncadd [#allocation5], %s16
      %s18 = sshll.u32 [#allocation4], 4
      %s19 = int_to_ptr.vmem [resolvable:$true] %s18
      %24 = dma.hbm_to_vmem [thread:$0]  %s0, 256, %s19, [#allocation5], 128, 128, 8
    $region5: #{tpu_custom_call.1} parent=1 // pred_fallthru
      _
    // Predicated region
    $region6: #{tpu_custom_call.1} parent=1 // pred_check
      _
    $region7: #{tpu_custom_call.1} parent=1 // pred_check_branch
      %26 = sbr.rel (0) target = $region9
    $region8: #{tpu_custom_call.1} parent=1 // pred_region
      %s28 = ssub.s32 256, 256
      %29 = vsyncadd [#allocation8], %s28
      %s30 = sshll.u32 [#allocation7], 4
      %s31 = int_to_ptr.vmem [resolvable:$true] %s30
      %36 = dma.hbm_to_vmem [thread:$0]  %s1, 256, %s31, [#allocation8], 128, 128, 8
    $region9: #{tpu_custom_call.1} parent=1 // pred_fallthru
      _
    // Predicated region
    $region10: #{tpu_custom_call.1} parent=1 // pred_check
      _
    $region11: #{tpu_custom_call.1} parent=1 // pred_check_branch
      %38 = sbr.rel (0) target = $region13
    $region12: #{tpu_custom_call.1} parent=1 // pred_region
      %39 = dma.done [#allocation5], 256
    $region13: #{tpu_custom_call.1} parent=1 // pred_fallthru
      _
    // Predicated region
    $region14: #{tpu_custom_call.1} parent=1 // pred_check
      _
    $region15: #{tpu_custom_call.1} parent=1 // pred_check_branch
      %41 = sbr.rel (0) target = $region17
    $region16: #{tpu_custom_call.1} parent=1 // pred_region
      %42 = dma.done [#allocation8], 256
    $region17: #{tpu_custom_call.1} parent=1 // pred_fallthru
      _
    %p43 = scmp.eq.s32.totalorder 0, 0
    // Predicated region
    $region18: #{tpu_custom_call.1} parent=1 // pred_check
      %p44 = pneg %p43
    $region19: #{tpu_custom_call.1} parent=1 // pred_check_branch
      %46 = sbr.rel (%p44) target = $region21
    $region20: #{tpu_custom_call.1} parent=1 // pred_region
      %vm47 = vcmask 7168
      %48 = vst.msk [vmem:[#allocation2] sm:$0xff] %vm47, 0.0
      %49 = vst.msk [vmem:[#allocation2 + $0x8] sm:$0xff] %vm47, 0.0
      %vm50 = vcmask 0
      %51 = vst.msk [vmem:[#allocation3] sm:$0x1] %vm50, 0.0
    $region21: #{tpu_custom_call.1} parent=1 // pred_fallthru
      _
    %v52 = vld [vmem:[#allocation4] sm:$0xff]
    %v53 = vld [vmem:[#allocation4 + $0x8] sm:$0xff]
    %v54 = vld [vmem:[#allocation7] sm:$0xff]
    %v55 = vld [vmem:[#allocation7 + $0x8] sm:$0xff]
    %vm56 = vcmask 261120
    %v58 = vsel %vm56, %v52, 0
    %v61 = vsel %vm56, %v53, 0
    %v64 = vsel %vm56, %v54, 0
    %v67 = vsel %vm56, %v55, 0
    %69 = vmatprep.subr.mxu0 0.0
    %70 = vmatpush1.xpose.msra.mxu0 %v64
    %71 = vmatprep.subr.mxu0 0.0
    %72 = vmatpush1.xpose.msra.mxu0 %v67
    %73 = vmatprep.subr.mxu0 0.0
    %74 = vmatpush1.xpose.msra.mxu0 0.0
    %75 = vmatprep.subr.mxu0 0.0
    %76 = vmatpush1.xpose.msra.mxu0 0.0
    %77 = vmatprep.subr.mxu0 0.0
    %78 = vmatpush1.xpose.msra.mxu0 0.0
    %79 = vmatprep.subr.mxu0 0.0
    %80 = vmatpush1.xpose.msra.mxu0 0.0
    %81 = vmatprep.subr.mxu0 0.0
    %82 = vmatpush1.xpose.msra.mxu0 0.0
    %83 = vmatprep.subr.mxu0 0.0
    %84 = vmatpush1.xpose.msra.mxu0 0.0
    %85 = vmatprep.subr.mxu0 0.0
    %86 = vmatpush1.xpose.msra.mxu0 0.0
    %87 = vmatprep.subr.mxu0 0.0
    %88 = vmatpush1.xpose.msra.mxu0 0.0
    %89 = vmatprep.subr.mxu0 0.0
    %90 = vmatpush1.xpose.msra.mxu0 0.0
    %91 = vmatprep.subr.mxu0 0.0
    %92 = vmatpush1.xpose.msra.mxu0 0.0
    %93 = vmatprep.subr.mxu0 0.0
    %94 = vmatpush1.xpose.msra.mxu0 0.0
    %95 = vmatprep.subr.mxu0 0.0
    %96 = vmatpush1.xpose.msra.mxu0 0.0
    %97 = vmatprep.subr.mxu0 0.0
    %98 = vmatpush1.xpose.msra.mxu0 0.0
    %99 = vmatprep.subr.mxu0 0.0
    %100 = vmatpush1.xpose.msra.mxu0 0.0
    %101 = vmatprep.subr.mxu0 0.0
    %102 = vmatpush1.xpose.msra.mxu0 0.0
    %103 = vmatprep.subr.mxu0 0.0
    %104 = vmatpush1.xpose.msra.mxu0 0.0
    %105 = vmatprep.subr.mxu0 0.0
    %106 = vmatpush1.xpose.msra.mxu0 0.0
    %107 = vmatprep.subr.mxu0 0.0
    %108 = vmatpush1.xpose.msra.mxu0 0.0
    %109 = vmatprep.subr.mxu0 0.0
    %110 = vmatpush1.xpose.msra.mxu0 0.0
    %111 = vmatprep.subr.mxu0 0.0
    %112 = vmatpush1.xpose.msra.mxu0 0.0
    %113 = vmatprep.subr.mxu0 0.0
    %114 = vmatpush1.xpose.msra.mxu0 0.0
    %115 = vmatprep.subr.mxu0 0.0
    %116 = vmatpush1.xpose.msra.mxu0 0.0
    %117 = vmatprep.subr.mxu0 0.0
    %118 = vmatpush1.xpose.msra.mxu0 0.0
    %119 = vmatprep.subr.mxu0 0.0
    %120 = vmatpush1.xpose.msra.mxu0 0.0
    %121 = vmatprep.subr.mxu0 0.0
    %122 = vmatpush1.xpose.msra.mxu0 0.0
    %123 = vmatprep.subr.mxu0 0.0
    %124 = vmatpush1.xpose.msra.mxu0 0.0
    %125 = vmatprep.subr.mxu0 0.0
    %126 = vmatpush1.xpose.msra.mxu0 0.0
    %127 = vmatprep.subr.mxu0 0.0
    %128 = vmatpush1.xpose.msra.mxu0 0.0
    %129 = vmatprep.subr.mxu0 0.0
    %130 = vmatpush1.xpose.msra.mxu0 0.0
    %131 = vmatprep.subr.mxu0 0.0
    %132 = vmatpush1.xpose.msra.mxu0 0.0
    %133 = vmatprep.mubr.f32.mxu0 0.0
    %134 = vmatmul.mubr.f32.gmra.mrb[0].mxu0 %v58
    %v135 = vpop.f32.mrb[0].mxu0
    %v136 = vadd.f32 0.0, %v135
    %v137 = vpop.f32.mrb[0].mxu0
    %138 = vmatprep.mubr.f32.mxu0 0.0
    %139 = vmatmul.mubr.f32.gmra.mrb[0].mxu0 %v61
    %v140 = vpop.f32.mrb[0].mxu0
    %v141 = vadd.f32 0.0, %v140
    %v142 = vpop.f32.mrb[0].mxu0
    %143 = vdwg.mxu0
    %v144 = vsub.f32 %v136, 1.0
    %v145 = vsub.f32 %v141, 1.0
    %v146 = vmul.f32 %v144, 14.285714
    %v147 = vmul.f32 %v145, 14.285714
    %v148 = vmul.f32 %v146, 1.442695
    %v149 = vpow.pop %v148
    %v150 = vmul.f32 %v147, 1.442695
    %v151 = vpow.pop %v150
    %v152 = vld [vmem:[#allocation2] sm:$0xff]
    %v153 = vld [vmem:[#allocation2 + $0x8] sm:$0xff]
    %vm154 = vcmask 130048
    %v155 = vsel %vm154, %v149, 0.0
    %156 = vadd.xlane.f32.xlu0 %v155
    %v157 = vpop.xlane.xlu0 %156
    %v158 = vsel %vm154, %v151, 0.0
    %159 = vadd.xlane.f32.xlu0 %v158
    %v160 = vpop.xlane.xlu0 %159
    %v161 = vadd.f32 %v152, %v157
    %v162 = vadd.f32 %v153, %v160
    %vm163 = vcmask 7168
    %164 = vst.msk [vmem:[#allocation2] sm:$0xff] %vm163, %v161
    %165 = vst.msk [vmem:[#allocation2 + $0x8] sm:$0xff] %vm163, %v162
    %v166 = vadd.f32 %v155, %v158
    %v167 = vrot.slane %v166, 4
    %v168 = vadd.f32 %v166, %v167
    %v169 = vrot.slane %v168, 2
    %v170 = vadd.f32 %v168, %v169
    %v171 = vrot.slane %v170, 1
    %v172 = vadd.f32 %v170, %v171
    %vm173 = vcmask 122880
    %174 = vst.msk [vmem:[#allocation9] sm:$0x1] %vm173, %v172
    %s175 = smul.u32 0, 16
    %s176 = sadd.s32 0, 1
    %s177 = smul.u32 %s176, 16
    %p178 = scmp.lt.s32.totalorder %s175, %s177
    %s179 = smul.u32 0, 16
    %s180 = sadd.s32 0, 1
    %s181 = smul.u32 %s180, 16
    %p182 = scmp.lt.s32.totalorder %s179, %s181
    %p183 = pnand %p178, %p182
    %p184 = pneg %p183
    // Predicated region
    $region22: #{tpu_custom_call.1} parent=1 // pred_check
      _
    $region23: #{tpu_custom_call.1} parent=1 // pred_check_branch
      %186 = sbr.rel (%p183) target = $region25
    $region24: #{tpu_custom_call.1} parent=1 // pred_region
      %v187 = vlaneseq
      %v188 = vshrl.u32 %v187, 7
      %v189 = vadd.s32 %v188, 8
      %v190 = vstv %s179
      %v191 = vadd.s32 %v190, %v188
      %v192 = vadd.s32 %v190, %v189
      %v193 = vlaneseq
      %v194 = vand.u32 %v193, 127
      %v195 = vstv %s175
      %v196 = vadd.s32 %v195, %v194
      %vm197 = vcmp.eq.s32.totalorder %v191, %v196
      %vm198 = vcmp.eq.s32.totalorder %v192, %v196
      %v199 = vsel %vm197, %v136, 0.0
      %v200 = vsel %vm198, %v141, 0.0
      %v201 = vld [vmem:[#allocation3] sm:$0x1]
      %v202 = vsel %vm154, %v199, 0.0
      %v203 = vsel %vm154, %v200, 0.0
      %v204 = vadd.f32 %v202, %v203
      %205 = vadd.xlane.f32.xlu0 %v204
      %v206 = vpop.xlane.xlu0 %205
      %v207 = vrot.slane %v206, 4
      %v208 = vadd.f32 %v206, %v207
      %v209 = vrot.slane %v208, 2
      %v210 = vadd.f32 %v208, %v209
      %v211 = vrot.slane %v210, 1
      %v212 = vadd.f32 %v210, %v211
      %s213 = vtos %v212
      %v214 = vstv %s213
      %v215 = vadd.f32 %v201, %v214
      %vm216 = vcmask 0
      %217 = vst.msk [vmem:[#allocation3] sm:$0x1] %vm216, %v215
    $region25: #{tpu_custom_call.1} parent=1 // pred_fallthru
      _
    // Predicated region
    $region26: #{tpu_custom_call.1} parent=1 // pred_check
      %p218 = pneg %p43
    $region27: #{tpu_custom_call.1} parent=1 // pred_check_branch
      %220 = sbr.rel (%p218) target = $region29
    $region28: #{tpu_custom_call.1} parent=1 // pred_region
      %v221 = vld [vmem:[#allocation2] sm:$0xff]
      %v222 = vld [vmem:[#allocation2 + $0x8] sm:$0xff]
      %v223 = vlog2.pop %v221
      %v224 = vmul.f32 %v223, 0.6931472
      %v225 = vlog2.pop %v222
      %v226 = vmul.f32 %v225, 0.6931472
      %v227 = vsel %vm163, %v224, 0.0
      %v228 = vsel %vm163, %v226, 0.0
      %v229 = vadd.f32 %v227, %v228
      %230 = vadd.xlane.f32.xlu0 %v229
      %v231 = vpop.xlane.xlu0 %230
      %v232 = vrot.slane %v231, 4
      %v233 = vadd.f32 %v231, %v232
      %v234 = vrot.slane %v233, 2
      %v235 = vadd.f32 %v233, %v234
      %v236 = vrot.slane %v235, 1
      %v237 = vadd.f32 %v235, %v236
      %s238 = vtos %v237
      %v239 = vstv %s238
      %v240 = vld [vmem:[#allocation3] sm:$0x1]
      %v241 = vmul.f32 %v240, 28.571428
      %v242 = vsub.f32 %v239, %v241
      %vm243 = vcmask 0
      %244 = vst.msk [vmem:[#allocation10] sm:$0x1] %vm243, %v242
    $region29: #{tpu_custom_call.1} parent=1 // pred_fallthru
      _
    // Predicated region
    $region30: #{tpu_custom_call.1} parent=1 // pred_check
      _
    $region31: #{tpu_custom_call.1} parent=1 // pred_check_branch
      %246 = sbr.rel (0) target = $region33
    $region32: #{tpu_custom_call.1} parent=1 // pred_region
      %s248 = ssub.s32 16, 16
      %249 = vsyncadd [#allocation6], %s248
      %s251 = sshll.u32 [#allocation9], 4
      %s252 = int_to_ptr.vmem [resolvable:$true] %s251
      %254 = dma.vmem_to_hbm [thread:$0]  %s252, 16, %s2, [#allocation6]
    $region33: #{tpu_custom_call.1} parent=1 // pred_fallthru
      _
    // Predicated region
    $region34: #{tpu_custom_call.1} parent=1 // pred_check
      _
    $region35: #{tpu_custom_call.1} parent=1 // pred_check_branch
      %256 = sbr.rel (0) target = $region37
    $region36: #{tpu_custom_call.1} parent=1 // pred_region
      %s258 = ssub.s32 16, 16
      %259 = vsyncadd [#allocation11], %s258
      %s261 = sshll.u32 [#allocation10], 4
      %s262 = int_to_ptr.vmem [resolvable:$true] %s261
      %264 = dma.vmem_to_hbm [thread:$0]  %s262, 16, %s3, [#allocation11]
    $region37: #{tpu_custom_call.1} parent=1 // pred_fallthru
      _
    // Predicated region
    $region38: #{tpu_custom_call.1} parent=1 // pred_check
      _
    $region39: #{tpu_custom_call.1} parent=1 // pred_check_branch
      %266 = sbr.rel (0) target = $region41
    $region40: #{tpu_custom_call.1} parent=1 // pred_region
      %267 = dma.done [#allocation6], 16
    $region41: #{tpu_custom_call.1} parent=1 // pred_fallthru
      _
    // Predicated region
    $region42: #{tpu_custom_call.1} parent=1 // pred_check
      _
    $region43: #{tpu_custom_call.1} parent=1 // pred_check_branch
      %269 = sbr.rel (0) target = $region45
    $region44: #{tpu_custom_call.1} parent=1 // pred_region
      %270 = dma.done [#allocation11], 16
    $region45: #{tpu_custom_call.1} parent=1 // pred_fallthru
      _
    %271 = vsyncpa [#allocation5], 1
    %272 = vsyncpa [#allocation8], 1
    %273 = vsyncpa [#allocation6], 1
    %274 = vsyncpa [#allocation11], 1

</llo_original>
